<compile_context>
chip_gen: v7x
topology: tpu7x:2x2x1
jax: 0.10.0
libtpu: 0.0.40
codegen_flags: <defaults>
</compile_context>

<pallas_src>
import functools

import jax
import jax.numpy as jnp
from jax.experimental import pallas as pl
from jax.experimental.pallas import tpu as pltpu


def _contrastive_kernel(a_ref, b_ref, s_out_ref, im_out_ref, *,
                        margin, max_violation, eps, tm, approx_recip):
    i = pl.program_id(0)
    row0 = pl.multiple_of(i * tm, tm)
    B, D = b_ref.shape

    # Rows of `a` handled by this grid step + the matching rows of `b`
    # (needed for this tile's own diagonal entries d1).
    a_tile = a_ref[pl.ds(row0, tm), :]            # (tm, D) storage dtype
    b_tile = b_ref[pl.ds(row0, tm), :]            # (tm, D)
    a_full = a_ref[...]                           # (B, D)
    b_full = b_ref[...]                           # (B, D)

    # Pairwise dot products on the MXU, contracting the last dims directly
    # (equivalent to a_tile @ b_full.T, f32 accumulation).
    w12 = jax.lax.dot_general(
        a_tile, b_full,
        dimension_numbers=(((1,), (1,)), ((), ())),
        preferred_element_type=jnp.float32)       # (tm, B)

    at = a_tile.astype(jnp.float32)
    bt = b_tile.astype(jnp.float32)
    af = a_full.astype(jnp.float32)
    bf = b_full.astype(jnp.float32)

    # Row L2 norms.
    w1_tile = jnp.sqrt(jnp.sum(at * at, axis=-1, keepdims=True))     # (tm, 1)
    w2_full = jnp.sqrt(jnp.sum(bf * bf, axis=-1, keepdims=True))     # (B, 1)
    w2_row = w2_full.T                                                # (1, B)

    inv_den = pl.reciprocal(jnp.maximum(w1_tile * w2_row, eps),
                            approx=approx_recip)
    scores = w12 * inv_den                                            # (tm, B)

    # Full diagonal of the score matrix, straight from the inputs
    # (O(B*D) elementwise; no (B, B) select / extra XLU reduction).
    w1_full = jnp.sqrt(jnp.sum(af * af, axis=-1, keepdims=True))      # (B, 1)
    diag_full = (jnp.sum(af * bf, axis=-1, keepdims=True)
                 * pl.reciprocal(jnp.maximum(w1_full * w2_full, eps),
                                 approx=approx_recip))                 # (B, 1)
    d2 = diag_full.T                                                   # (1, B)

    # Diagonal entries for this tile's rows (recomputed from the tile
    # slices; identical to the matching entries of diag_full).
    w2_tile = jnp.sqrt(jnp.sum(bt * bt, axis=-1, keepdims=True))       # (tm, 1)
    d1 = (jnp.sum(at * bt, axis=-1, keepdims=True)
          * pl.reciprocal(jnp.maximum(w1_tile * w2_tile, eps),
                          approx=approx_recip))                        # (tm, 1)

    # Hinge costs; `margin + scores` computed once and shared.
    ms = scores + margin
    rows = row0 + jax.lax.broadcasted_iota(jnp.int32, (tm, B), 0)
    cols = jax.lax.broadcasted_iota(jnp.int32, (tm, B), 1)
    keep = (rows != cols).astype(jnp.float32)     # zero the global diagonal
    cost_s = keep * jnp.maximum(ms - d1, 0.0)
    cost_im = keep * jnp.maximum(ms - d2, 0.0)

    if max_violation:
        # Per-row max (this tile owns the full column range) -> scalar sum.
        s_part = jnp.sum(jnp.max(cost_s, axis=1, keepdims=True),
                         axis=0, keepdims=True)                        # (1, 1)
        # Partial column max; combined across tiles in the wrapper.
        im_part = jnp.max(cost_im, axis=0, keepdims=True)              # (1, B)
    else:
        s_part = jnp.sum(cost_s).reshape(1, 1)                         # (1, 1)
        im_part = jnp.sum(cost_im, axis=0, keepdims=True)              # (1, B)

    s_out_ref[...] = jnp.reshape(s_part, (1, 1, 1))
    im_out_ref[...] = jnp.reshape(im_part, (1, 1, B))


def global_contrastive_loss(im, s, s_l=None, *, cross_attn="i2t",
                            margin=0.0, max_violation=False, eps=1e-8,
                            row_tile=256, approx_recip=False):
    """Forward pass of global_ContrastiveLoss.

    `s_l` (caption lengths) is accepted for API parity but unused, exactly as
    in the PyTorch global_cos path.
    """
    if cross_attn == "i2t":
        a, b = im, s
    elif cross_attn == "t2i":
        a, b = s, im
    else:
        raise ValueError("unknown cross_attn type: %s" % cross_attn)

    B, D = a.shape
    assert b.shape == (B, D), (a.shape, b.shape)

    # Row-tile size: MXU-friendly multiple when B allows it, otherwise one tile.
    tm = row_tile if (row_tile > 0 and B % row_tile == 0) else B
    num_tiles = B // tm

    kernel = functools.partial(
        _contrastive_kernel,
        margin=float(margin),
        max_violation=bool(max_violation),
        eps=float(eps),
        tm=tm,
        approx_recip=bool(approx_recip),
    )

    s_out, im_out = pl.pallas_call(
        kernel,
        out_shape=(
            jax.ShapeDtypeStruct((num_tiles, 1, 1), jnp.float32),
            jax.ShapeDtypeStruct((num_tiles, 1, B), jnp.float32),
        ),
        grid=(num_tiles,),
        in_specs=[
            pl.BlockSpec((B, D), lambda i: (0, 0)),
            pl.BlockSpec((B, D), lambda i: (0, 0)),
        ],
        out_specs=(
            pl.BlockSpec((1, 1, 1), lambda i: (i, 0, 0)),
            pl.BlockSpec((1, 1, B), lambda i: (i, 0, 0)),
        ),
        compiler_params=pltpu.CompilerParams(
            dimension_semantics=("parallel",)),
    )(a, b)

    if max_violation:
        # cost_im column-max is reduced across row tiles outside the kernel.
        return jnp.sum(s_out) + jnp.sum(jnp.max(im_out[:, 0, :], axis=0))
    return jnp.sum(s_out) + jnp.sum(im_out)


def _reference_loss(im, s, *, cross_attn="i2t", margin=0.0,
                    max_violation=False, eps=1e-8):
    """Pure-JAX reference mirroring the PyTorch forward (sanity check)."""
    a, b = (im, s) if cross_attn == "i2t" else (s, im)
    w12 = a @ b.T
    w1 = jnp.linalg.norm(a, axis=-1, keepdims=True)
    w2 = jnp.linalg.norm(b, axis=-1, keepdims=True).T
    scores = w12 / jnp.maximum(w1 * w2, eps)
    diag = jnp.diag(scores)[:, None]
    eye = jnp.eye(scores.shape[0], dtype=bool)
    cost_s = jnp.where(eye, 0.0, jnp.maximum(margin + scores - diag, 0.0))
    cost_im = jnp.where(eye, 0.0, jnp.maximum(margin + scores - diag.T, 0.0))
    if max_violation:
        return jnp.sum(jnp.max(cost_s, axis=1)) + jnp.sum(jnp.max(cost_im, axis=0))
    return jnp.sum(cost_s) + jnp.sum(cost_im)


if __name__ == "__main__":
    key = jax.random.PRNGKey(0)
    k_im, k_s, k_im2, k_s2 = jax.random.split(key, 4)

    # Small config consistent with the module: batch=8, hidden=32.
    B, D = 8, 32
    im = jax.random.normal(k_im, (B, D), dtype=jnp.float32)
    s = jax.random.normal(k_s, (B, D), dtype=jnp.float32)
    s_l = jnp.full((B,), 8, dtype=jnp.int32)  # caption lengths (unused by global path)

    cases = [
        ("i2t", 0.0, False),
        ("i2t", 0.2, True),
        ("t2i", 0.1, False),
        ("t2i", 0.2, True),
    ]
    for cross_attn, margin, max_violation in cases:
        out = global_contrastive_loss(im, s, s_l, cross_attn=cross_attn,
                                      margin=margin, max_violation=max_violation)
        out = jax.block_until_ready(out)
        ref = _reference_loss(im, s, cross_attn=cross_attn, margin=margin,
                              max_violation=max_violation)
        assert jnp.allclose(out, ref, rtol=1e-5, atol=1e-5), (
            cross_attn, margin, max_violation, out, ref)

    # Multi-tile path (2 row tiles) to exercise the parallel grid and the
    # cross-tile combine for both reduction modes.
    B2, D2 = 16, 32
    im2 = jax.random.normal(k_im2, (B2, D2), dtype=jnp.float32)
    s2 = jax.random.normal(k_s2, (B2, D2), dtype=jnp.float32)
    for max_violation in (False, True):
        out = global_contrastive_loss(im2, s2, None, cross_attn="i2t",
                                      margin=0.2, max_violation=max_violation,
                                      row_tile=8)
        out = jax.block_until_ready(out)
        ref = _reference_loss(im2, s2, cross_attn="i2t", margin=0.2,
                              max_violation=max_violation)
        assert jnp.allclose(out, ref, rtol=1e-5, atol=1e-5), (max_violation, out, ref)

    print("KERNEL_OK")
</pallas_src>

<mosaic_0001>
module attributes {stable_mosaic.version = 11 : i64} {
  func.func @_contrastive_kernel(%arg0: i32, %arg1: memref<8x32xf32, #tpu.memory_space<vmem>>, %arg2: memref<8x32xf32, #tpu.memory_space<vmem>>, %arg3: memref<1x1x1xf32, #tpu.memory_space<vmem>>, %arg4: memref<1x1x8xf32, #tpu.memory_space<vmem>>) attributes {dimension_semantics = [#tpu.dimension_semantics<parallel>], iteration_bounds = array<i64: 1>, scalar_prefetch = 0 : i64, scratch_operands = 0 : i64, tpu.core_type = #tpu.core_type<tc>, window_params = [{pipeline_mode = #tpu.pipeline_mode<synchronous>, transform_indices = @transform_0, window_bounds = array<i64: 8, 32>}, {pipeline_mode = #tpu.pipeline_mode<synchronous>, transform_indices = @transform_1, window_bounds = array<i64: 8, 32>}, {transform_indices = @transform_2, window_bounds = array<i64: 1, 1, 1>}, {transform_indices = @transform_3, window_bounds = array<i64: 1, 1, 8>}]} {
    %c8_i32 = arith.constant 8 : i32
    %0 = arith.muli %arg0, %c8_i32 : i32
    %1 = tpu.assume_multiple %0, 8 : i32
    %2 = arith.index_cast %1 : i32 to index
    %c0 = arith.constant 0 : index
    %3 = vector.load %arg1[%2, %c0] : memref<8x32xf32, #tpu.memory_space<vmem>>, vector<8x32xf32>
    %4 = arith.index_cast %1 : i32 to index
    %c0_0 = arith.constant 0 : index
    %5 = vector.load %arg2[%4, %c0_0] : memref<8x32xf32, #tpu.memory_space<vmem>>, vector<8x32xf32>
    %c0_1 = arith.constant 0 : index
    %c0_2 = arith.constant 0 : index
    %6 = vector.load %arg1[%c0_1, %c0_2] : memref<8x32xf32, #tpu.memory_space<vmem>>, vector<8x32xf32>
    %c0_3 = arith.constant 0 : index
    %c0_4 = arith.constant 0 : index
    %7 = vector.load %arg2[%c0_3, %c0_4] : memref<8x32xf32, #tpu.memory_space<vmem>>, vector<8x32xf32>
    %cst = arith.constant dense<0.000000e+00> : vector<8x8xf32>
    %8 = tpu.matmul %3, %7, %cst {dimension_numbers = #tpu.dot_dimension_numbers<[1], [1], [0], [0], [0, 0, 1, 0], [], []>} : vector<8x32xf32>, vector<8x32xf32>, vector<8x8xf32> -> vector<8x8xf32>
    %9 = arith.mulf %3, %3 : vector<8x32xf32>
    %cst_5 = arith.constant dense<0.000000e+00> : vector<8xf32>
    %10 = vector.multi_reduction <add>, %9, %cst_5 [1] : vector<8x32xf32> to vector<8xf32>
    %11 = vector.shape_cast %10 : vector<8xf32> to vector<8x1xf32>
    %12 = math.sqrt %11 : vector<8x1xf32>
    %13 = arith.mulf %7, %7 : vector<8x32xf32>
    %cst_6 = arith.constant dense<0.000000e+00> : vector<8xf32>
    %14 = vector.multi_reduction <add>, %13, %cst_6 [1] : vector<8x32xf32> to vector<8xf32>
    %15 = vector.shape_cast %14 : vector<8xf32> to vector<8x1xf32>
    %16 = math.sqrt %15 : vector<8x1xf32>
    %17 = tpu.transpose %16, [1, 0] : vector<8x1xf32> -> vector<1x8xf32>
    %18 = vector.broadcast %12 : vector<8x1xf32> to vector<8x8xf32>
    %19 = vector.broadcast %17 : vector<1x8xf32> to vector<8x8xf32>
    %20 = arith.mulf %18, %19 : vector<8x8xf32>
    %cst_7 = arith.constant 9.99999993E-9 : f32
    %21 = vector.broadcast %cst_7 : f32 to vector<8x8xf32>
    %22 = arith.maximumf %20, %21 : vector<8x8xf32>
    %23 = tpu.reciprocal %22 : vector<8x8xf32> -> vector<8x8xf32>
    %24 = arith.mulf %8, %23 : vector<8x8xf32>
    %25 = arith.mulf %6, %6 : vector<8x32xf32>
    %cst_8 = arith.constant dense<0.000000e+00> : vector<8xf32>
    %26 = vector.multi_reduction <add>, %25, %cst_8 [1] : vector<8x32xf32> to vector<8xf32>
    %27 = vector.shape_cast %26 : vector<8xf32> to vector<8x1xf32>
    %28 = math.sqrt %27 : vector<8x1xf32>
    %29 = arith.mulf %6, %7 : vector<8x32xf32>
    %cst_9 = arith.constant dense<0.000000e+00> : vector<8xf32>
    %30 = vector.multi_reduction <add>, %29, %cst_9 [1] : vector<8x32xf32> to vector<8xf32>
    %31 = vector.shape_cast %30 : vector<8xf32> to vector<8x1xf32>
    %32 = arith.mulf %28, %16 : vector<8x1xf32>
    %cst_10 = arith.constant 9.99999993E-9 : f32
    %33 = vector.broadcast %cst_10 : f32 to vector<8x1xf32>
    %34 = arith.maximumf %32, %33 : vector<8x1xf32>
    %35 = tpu.reciprocal %34 : vector<8x1xf32> -> vector<8x1xf32>
    %36 = arith.mulf %31, %35 : vector<8x1xf32>
    %37 = tpu.transpose %36, [1, 0] : vector<8x1xf32> -> vector<1x8xf32>
    %38 = arith.mulf %5, %5 : vector<8x32xf32>
    %cst_11 = arith.constant dense<0.000000e+00> : vector<8xf32>
    %39 = vector.multi_reduction <add>, %38, %cst_11 [1] : vector<8x32xf32> to vector<8xf32>
    %40 = vector.shape_cast %39 : vector<8xf32> to vector<8x1xf32>
    %41 = math.sqrt %40 : vector<8x1xf32>
    %42 = arith.mulf %3, %5 : vector<8x32xf32>
    %cst_12 = arith.constant dense<0.000000e+00> : vector<8xf32>
    %43 = vector.multi_reduction <add>, %42, %cst_12 [1] : vector<8x32xf32> to vector<8xf32>
    %44 = vector.shape_cast %43 : vector<8xf32> to vector<8x1xf32>
    %45 = arith.mulf %12, %41 : vector<8x1xf32>
    %cst_13 = arith.constant 9.99999993E-9 : f32
    %46 = vector.broadcast %cst_13 : f32 to vector<8x1xf32>
    %47 = arith.maximumf %45, %46 : vector<8x1xf32>
    %48 = tpu.reciprocal %47 : vector<8x1xf32> -> vector<8x1xf32>
    %49 = arith.mulf %44, %48 : vector<8x1xf32>
    %cst_14 = arith.constant 0.000000e+00 : f32
    %50 = vector.broadcast %cst_14 : f32 to vector<8x8xf32>
    %51 = arith.addf %24, %50 : vector<8x8xf32>
    %52 = tpu.iota {dimensions = array<i32: 0>} : vector<8x8xi32>
    %53 = vector.broadcast %1 : i32 to vector<8x8xi32>
    %54 = arith.addi %53, %52 : vector<8x8xi32>
    %55 = tpu.iota {dimensions = array<i32: 1>} : vector<8x8xi32>
    %56 = arith.cmpi ne, %54, %55 : vector<8x8xi32>
    %57 = arith.extui %56 : vector<8x8xi1> to vector<8x8xi32>
    %58 = arith.sitofp %57 : vector<8x8xi32> to vector<8x8xf32>
    %59 = vector.broadcast %49 : vector<8x1xf32> to vector<8x8xf32>
    %60 = arith.subf %51, %59 : vector<8x8xf32>
    %cst_15 = arith.constant 0.000000e+00 : f32
    %61 = vector.broadcast %cst_15 : f32 to vector<8x8xf32>
    %62 = arith.maximumf %60, %61 : vector<8x8xf32>
    %63 = arith.mulf %58, %62 : vector<8x8xf32>
    %64 = vector.broadcast %37 : vector<1x8xf32> to vector<8x8xf32>
    %65 = arith.subf %51, %64 : vector<8x8xf32>
    %cst_16 = arith.constant 0.000000e+00 : f32
    %66 = vector.broadcast %cst_16 : f32 to vector<8x8xf32>
    %67 = arith.maximumf %65, %66 : vector<8x8xf32>
    %68 = arith.mulf %58, %67 : vector<8x8xf32>
    %69 = vector.shape_cast %63 : vector<8x8xf32> to vector<1x8x8xf32>
    %cst_17 = arith.constant dense<0.000000e+00> : vector<1xf32>
    %70 = vector.multi_reduction <add>, %69, %cst_17 [1, 2] : vector<1x8x8xf32> to vector<1xf32>
    %71 = vector.shape_cast %70 : vector<1xf32> to vector<1x1x1xf32>
    %72 = vector.extract %71[0, 0, 0] : f32 from vector<1x1x1xf32>
    %73 = vector.broadcast %72 : f32 to vector<1x1xf32>
    %cst_18 = arith.constant dense<0.000000e+00> : vector<8xf32>
    %74 = vector.multi_reduction <add>, %68, %cst_18 [0] : vector<8x8xf32> to vector<8xf32>
    %75 = vector.shape_cast %74 : vector<8xf32> to vector<1x8xf32>
    %76 = vector.shape_cast %73 : vector<1x1xf32> to vector<1x1x1xf32>
    %c0_19 = arith.constant 0 : index
    %c0_20 = arith.constant 0 : index
    %c0_21 = arith.constant 0 : index
    %77 = vector.load %arg3[%c0_19, %c0_20, %c0_21] : memref<1x1x1xf32, #tpu.memory_space<vmem>>, vector<1x1x1xf32>
    tpu.vector_store %arg3[%c0_19, %c0_20, %c0_21], %76 {strides = array<i32>} : memref<1x1x1xf32, #tpu.memory_space<vmem>>, vector<1x1x1xf32>,
    %78 = vector.shape_cast %75 : vector<1x8xf32> to vector<1x1x8xf32>
    %c0_22 = arith.constant 0 : index
    %c0_23 = arith.constant 0 : index
    %c0_24 = arith.constant 0 : index
    %79 = vector.load %arg4[%c0_22, %c0_23, %c0_24] : memref<1x1x8xf32, #tpu.memory_space<vmem>>, vector<1x1x8xf32>
    tpu.vector_store %arg4[%c0_22, %c0_23, %c0_24], %78 {strides = array<i32>} : memref<1x1x8xf32, #tpu.memory_space<vmem>>, vector<1x1x8xf32>,
    return
  }
  func.func @transform_0(%arg0: i32) -> (i32, i32) {
    %c0_i32 = arith.constant 0 : i32
    %c0_i32_0 = arith.constant 0 : i32
    %c0_i32_1 = arith.constant 0 : i32
    return %c0_i32, %c0_i32_0 : i32, i32
  }
  func.func @transform_1(%arg0: i32) -> (i32, i32) {
    %c0_i32 = arith.constant 0 : i32
    %c0_i32_0 = arith.constant 0 : i32
    %c0_i32_1 = arith.constant 0 : i32
    return %c0_i32, %c0_i32_0 : i32, i32
  }
  func.func @transform_2(%arg0: i32) -> (i32, i32, i32) {
    %c0_i32 = arith.constant 0 : i32
    %c0_i32_0 = arith.constant 0 : i32
    %c0_i32_1 = arith.constant 0 : i32
    return %arg0, %c0_i32, %c0_i32_0 : i32, i32, i32
  }
  func.func @transform_3(%arg0: i32) -> (i32, i32, i32) {
    %c0_i32 = arith.constant 0 : i32
    %c0_i32_0 = arith.constant 0 : i32
    %c0_i32_1 = arith.constant 0 : i32
    return %arg0, %c0_i32, %c0_i32_0 : i32, i32, i32
  }
}

</mosaic_0001>

<llo_original>
// kernel: tpu_custom_call.1
$region0: #{tpu_custom_call.1}
  #allocation0 [shape = 'u32[]', space=smem, size = 0x4, offset = 0x4, fixed_abs, tag = 'smem constant byte address 0x4 - core index']
  #allocation1 [shape = 'u32[144,128]{1,0:T(1,128)}', space=vmem, size = 0x12000, scoped, tag = 'internal scratch']
  %s0 = inlined_call_operand.hbm [shape: f32[8,32], index: 0, kind: input, shape index: {}]
  %s1 = inlined_call_operand.hbm [shape: f32[8,32], index: 1, kind: input, shape index: {}]
  %s2 = inlined_call_operand.hbm [shape: f32[1,1,1], index: 2, kind: output, shape index: {0}]
  %s3 = inlined_call_operand.hbm [shape: f32[1,1,8], index: 3, kind: output, shape index: {1}]
  %4 = xla_tuple %s2, %s3
  %s5 = sld [smem:[#allocation0]]
  $region34: #{tpu_custom_call.1} parent=0
    _
  %s7 = ssub.s32 1, %s5
  %s8 = scalar_select 0, %s7, %s5
  $region1: #{tpu_custom_call.1} parent=0
    #allocation2 [shape = 'u8[4096]{0}', space=vmem, size = 0x1000, scoped, tag = 'input window, operand 0, single buffered']
    #allocation3 [shape = 's32[1]{0}', space=sflag, size = 0x4, scoped, tag = 'scoped memory for tpu_custom_call.1']
    #allocation4 [shape = 's32[1]{0}', space=sflag, size = 0x4, scoped, tag = 'scoped memory for tpu_custom_call.1']
    #allocation5 [shape = 'u8[4096]{0}', space=vmem, size = 0x1000, scoped, tag = 'input window, operand 1, single buffered']
    #allocation6 [shape = 's32[1]{0}', space=sflag, size = 0x4, scoped, tag = 'scoped memory for tpu_custom_call.1']
    #allocation7 [shape = 'u8[512]{0}', space=vmem, size = 0x400, scoped, tag = 'output window, operand 0, single buffered']
    #allocation8 [shape = 'u8[512]{0}', space=vmem, size = 0x400, scoped, tag = 'output window, operand 1, single buffered']
    #allocation9 [shape = 's32[1]{0}', space=sflag, size = 0x4, scoped, tag = 'scoped memory for tpu_custom_call.1']
    %9 = vsyncpa [#allocation3], 0
    %10 = vsyncpa [#allocation6], 0
    %11 = vsyncpa [#allocation4], 0
    %12 = vsyncpa [#allocation9], 0
    // Predicated region
    $region2: #{tpu_custom_call.1} parent=1 // pred_check
      _
    $region3: #{tpu_custom_call.1} parent=1 // pred_check_branch
      %14 = sbr.rel (0) target = $region5
    $region4: #{tpu_custom_call.1} parent=1 // pred_region
      %s16 = ssub.s32 128, 128
      %17 = vsyncadd [#allocation3], %s16
      %s19 = sshll.u32 [#allocation2], 4
      %s20 = int_to_ptr.vmem [resolvable:$true] %s19
      %22 = dma.hbm_to_vmem [thread:$0]  %s0, 128, %s20, [#allocation3]
    $region5: #{tpu_custom_call.1} parent=1 // pred_fallthru
      _
    // Predicated region
    $region6: #{tpu_custom_call.1} parent=1 // pred_check
      _
    $region7: #{tpu_custom_call.1} parent=1 // pred_check_branch
      %24 = sbr.rel (0) target = $region9
    $region8: #{tpu_custom_call.1} parent=1 // pred_region
      %s26 = ssub.s32 128, 128
      %27 = vsyncadd [#allocation6], %s26
      %s29 = sshll.u32 [#allocation5], 4
      %s30 = int_to_ptr.vmem [resolvable:$true] %s29
      %32 = dma.hbm_to_vmem [thread:$0]  %s1, 128, %s30, [#allocation6]
    $region9: #{tpu_custom_call.1} parent=1 // pred_fallthru
      _
    // Predicated region
    $region10: #{tpu_custom_call.1} parent=1 // pred_check
      _
    $region11: #{tpu_custom_call.1} parent=1 // pred_check_branch
      %34 = sbr.rel (0) target = $region13
    $region12: #{tpu_custom_call.1} parent=1 // pred_region
      %35 = dma.done [#allocation3], 128
    $region13: #{tpu_custom_call.1} parent=1 // pred_fallthru
      _
    // Predicated region
    $region14: #{tpu_custom_call.1} parent=1 // pred_check
      _
    $region15: #{tpu_custom_call.1} parent=1 // pred_check_branch
      %37 = sbr.rel (0) target = $region17
    $region16: #{tpu_custom_call.1} parent=1 // pred_region
      %38 = dma.done [#allocation6], 128
    $region17: #{tpu_custom_call.1} parent=1 // pred_fallthru
      _
    %s39 = smul.u32 0, 8
    %s40 = scalar_lea.vmem [#allocation2], %s39
    %v41 = vld [vmem:[%s40] sm:$0xff]
    %s42 = scalar_lea.vmem [#allocation5], %s39
    %v43 = vld [vmem:[%s42] sm:$0xff]
    %v44 = vld [vmem:[#allocation2] sm:$0xff]
    %v45 = vld [vmem:[#allocation5] sm:$0xff]
    %vm46 = vcmask 261120
    %v48 = vsel %vm46, %v41, 0
    %v51 = vsel %vm46, %v45, 0
    %53 = vmatprep.subr.mxu0 0.0
    %54 = vmatpush1.xpose.msra.mxu0 %v51
    %55 = vmatprep.subr.mxu0 0.0
    %56 = vmatpush1.xpose.msra.mxu0 0.0
    %57 = vmatprep.subr.mxu0 0.0
    %58 = vmatpush1.xpose.msra.mxu0 0.0
    %59 = vmatprep.subr.mxu0 0.0
    %60 = vmatpush1.xpose.msra.mxu0 0.0
    %61 = vmatprep.subr.mxu0 0.0
    %62 = vmatpush1.xpose.msra.mxu0 0.0
    %63 = vmatprep.subr.mxu0 0.0
    %64 = vmatpush1.xpose.msra.mxu0 0.0
    %65 = vmatprep.subr.mxu0 0.0
    %66 = vmatpush1.xpose.msra.mxu0 0.0
    %67 = vmatprep.subr.mxu0 0.0
    %68 = vmatpush1.xpose.msra.mxu0 0.0
    %69 = vmatprep.subr.mxu0 0.0
    %70 = vmatpush1.xpose.msra.mxu0 0.0
    %71 = vmatprep.subr.mxu0 0.0
    %72 = vmatpush1.xpose.msra.mxu0 0.0
    %73 = vmatprep.subr.mxu0 0.0
    %74 = vmatpush1.xpose.msra.mxu0 0.0
    %75 = vmatprep.subr.mxu0 0.0
    %76 = vmatpush1.xpose.msra.mxu0 0.0
    %77 = vmatprep.subr.mxu0 0.0
    %78 = vmatpush1.xpose.msra.mxu0 0.0
    %79 = vmatprep.subr.mxu0 0.0
    %80 = vmatpush1.xpose.msra.mxu0 0.0
    %81 = vmatprep.subr.mxu0 0.0
    %82 = vmatpush1.xpose.msra.mxu0 0.0
    %83 = vmatprep.subr.mxu0 0.0
    %84 = vmatpush1.xpose.msra.mxu0 0.0
    %85 = vmatprep.subr.mxu0 0.0
    %86 = vmatpush1.xpose.msra.mxu0 0.0
    %87 = vmatprep.subr.mxu0 0.0
    %88 = vmatpush1.xpose.msra.mxu0 0.0
    %89 = vmatprep.subr.mxu0 0.0
    %90 = vmatpush1.xpose.msra.mxu0 0.0
    %91 = vmatprep.subr.mxu0 0.0
    %92 = vmatpush1.xpose.msra.mxu0 0.0
    %93 = vmatprep.subr.mxu0 0.0
    %94 = vmatpush1.xpose.msra.mxu0 0.0
    %95 = vmatprep.subr.mxu0 0.0
    %96 = vmatpush1.xpose.msra.mxu0 0.0
    %97 = vmatprep.subr.mxu0 0.0
    %98 = vmatpush1.xpose.msra.mxu0 0.0
    %99 = vmatprep.subr.mxu0 0.0
    %100 = vmatpush1.xpose.msra.mxu0 0.0
    %101 = vmatprep.subr.mxu0 0.0
    %102 = vmatpush1.xpose.msra.mxu0 0.0
    %103 = vmatprep.subr.mxu0 0.0
    %104 = vmatpush1.xpose.msra.mxu0 0.0
    %105 = vmatprep.subr.mxu0 0.0
    %106 = vmatpush1.xpose.msra.mxu0 0.0
    %107 = vmatprep.subr.mxu0 0.0
    %108 = vmatpush1.xpose.msra.mxu0 0.0
    %109 = vmatprep.subr.mxu0 0.0
    %110 = vmatpush1.xpose.msra.mxu0 0.0
    %111 = vmatprep.subr.mxu0 0.0
    %112 = vmatpush1.xpose.msra.mxu0 0.0
    %113 = vmatprep.subr.mxu0 0.0
    %114 = vmatpush1.xpose.msra.mxu0 0.0
    %115 = vmatprep.subr.mxu0 0.0
    %116 = vmatpush1.xpose.msra.mxu0 0.0
    %117 = vmatprep.mubr.f32.mxu0 0.0
    %118 = vmatmul.mubr.f32.gmra.mrb[0].mxu0 %v48
    %v119 = vpop.f32.mrb[0].mxu0
    %v120 = vadd.f32 0.0, %v119
    %v121 = vpop.f32.mrb[0].mxu0
    %122 = vdwg.mxu0
    %v123 = vmul.f32 %v41, %v41
    %v124 = vsel %vm46, %v123, 0.0
    %125 = vadd.xlane.f32.xlu0 %v124
    %v126 = vpop.xlane.xlu0 %125
    %v127 = vrsqrt.pop %v126
    %v128 = vmul.f32 %v126, %v127
    %vm129 = vcmp.eq.f32.partialorder %v126, inf
    %v130 = vsel %vm129, %v126, %v128
    %vm131 = vcmp.eq.f32.partialorder %v126, 0.0
    %v132 = vand.u32 %v126, 2147483648
    %v133 = vsel %vm131, %v132, %v130
    %v134 = vmul.f32 %v45, %v45
    %v135 = vsel %vm46, %v134, 0.0
    %136 = vadd.xlane.f32.xlu0 %v135
    %v137 = vpop.xlane.xlu0 %136
    %v138 = vrsqrt.pop %v137
    %v139 = vmul.f32 %v137, %v138
    %vm140 = vcmp.eq.f32.partialorder %v137, inf
    %v141 = vsel %vm140, %v137, %v139
    %vm142 = vcmp.eq.f32.partialorder %v137, 0.0
    %v143 = vand.u32 %v137, 2147483648
    %v144 = vsel %vm142, %v143, %v141
    %145 = vxpose.xlu0.b32.start [1/16] %v144, 128
    %146 = vxpose.xlu0.b32.cont [2/16] 0.0, 128
    %147 = vxpose.xlu0.b32.cont [3/16] 0.0, 128
    %148 = vxpose.xlu0.b32.cont [4/16] 0.0, 128
    %149 = vxpose.xlu0.b32.cont [5/16] 0.0, 128
    %150 = vxpose.xlu0.b32.cont [6/16] 0.0, 128
    %151 = vxpose.xlu0.b32.cont [7/16] 0.0, 128
    %152 = vxpose.xlu0.b32.cont [8/16] 0.0, 128
    %153 = vxpose.xlu0.b32.cont [9/16] 0.0, 128
    %154 = vxpose.xlu0.b32.cont [10/16] 0.0, 128
    %155 = vxpose.xlu0.b32.cont [11/16] 0.0, 128
    %156 = vxpose.xlu0.b32.cont [12/16] 0.0, 128
    %157 = vxpose.xlu0.b32.cont [13/16] 0.0, 128
    %158 = vxpose.xlu0.b32.cont [14/16] 0.0, 128
    %159 = vxpose.xlu0.b32.cont [15/16] 0.0, 128
    %160 = vxpose.xlu0.b32.end [16/16] 0.0, 128
    %v161 = vpop.trf.xlu0
    %v162 = vpop.trf.xlu0
    %v163 = vpop.trf.xlu0
    %v164 = vpop.trf.xlu0
    %v165 = vpop.trf.xlu0
    %v166 = vpop.trf.xlu0
    %v167 = vpop.trf.xlu0
    %v168 = vpop.trf.xlu0
    %v169 = vpop.trf.xlu0
    %v170 = vpop.trf.xlu0
    %v171 = vpop.trf.xlu0
    %v172 = vpop.trf.xlu0
    %v173 = vpop.trf.xlu0
    %v174 = vpop.trf.xlu0
    %v175 = vpop.trf.xlu0
    %v176 = vpop.trf.xlu0
    %v177 = vlaneseq
    %v178 = vshrl.u32 %v177, 7
    %v179 = vsub.s32 0, %v178
    %v180 = vrot.slane %v161, %v179
    %v181 = vmul.f32 %v133, %v180
    %v182 = vmax.f32 %v181, 1e-08
    %v183 = vrcp.pop %v182
    %v184 = vmul.f32 %v120, %v183
    %v185 = vmul.f32 %v44, %v44
    %v186 = vsel %vm46, %v185, 0.0
    %187 = vadd.xlane.f32.xlu0 %v186
    %v188 = vpop.xlane.xlu0 %187
    %v189 = vrsqrt.pop %v188
    %v190 = vmul.f32 %v188, %v189
    %vm191 = vcmp.eq.f32.partialorder %v188, inf
    %v192 = vsel %vm191, %v188, %v190
    %vm193 = vcmp.eq.f32.partialorder %v188, 0.0
    %v194 = vand.u32 %v188, 2147483648
    %v195 = vsel %vm193, %v194, %v192
    %v196 = vmul.f32 %v44, %v45
    %v197 = vsel %vm46, %v196, 0.0
    %198 = vadd.xlane.f32.xlu0 %v197
    %v199 = vpop.xlane.xlu0 %198
    %v200 = vmul.f32 %v195, %v144
    %v201 = vmax.f32 %v200, 1e-08
    %v202 = vrcp.pop %v201
    %v203 = vmul.f32 %v199, %v202
    %204 = vxpose.xlu0.b32.start [1/16] %v203, 128
    %205 = vxpose.xlu0.b32.cont [2/16] 0.0, 128
    %206 = vxpose.xlu0.b32.cont [3/16] 0.0, 128
    %207 = vxpose.xlu0.b32.cont [4/16] 0.0, 128
    %208 = vxpose.xlu0.b32.cont [5/16] 0.0, 128
    %209 = vxpose.xlu0.b32.cont [6/16] 0.0, 128
    %210 = vxpose.xlu0.b32.cont [7/16] 0.0, 128
    %211 = vxpose.xlu0.b32.cont [8/16] 0.0, 128
    %212 = vxpose.xlu0.b32.cont [9/16] 0.0, 128
    %213 = vxpose.xlu0.b32.cont [10/16] 0.0, 128
    %214 = vxpose.xlu0.b32.cont [11/16] 0.0, 128
    %215 = vxpose.xlu0.b32.cont [12/16] 0.0, 128
    %216 = vxpose.xlu0.b32.cont [13/16] 0.0, 128
    %217 = vxpose.xlu0.b32.cont [14/16] 0.0, 128
    %218 = vxpose.xlu0.b32.cont [15/16] 0.0, 128
    %219 = vxpose.xlu0.b32.end [16/16] 0.0, 128
    %v220 = vpop.trf.xlu0
    %v221 = vpop.trf.xlu0
    %v222 = vpop.trf.xlu0
    %v223 = vpop.trf.xlu0
    %v224 = vpop.trf.xlu0
    %v225 = vpop.trf.xlu0
    %v226 = vpop.trf.xlu0
    %v227 = vpop.trf.xlu0
    %v228 = vpop.trf.xlu0
    %v229 = vpop.trf.xlu0
    %v230 = vpop.trf.xlu0
    %v231 = vpop.trf.xlu0
    %v232 = vpop.trf.xlu0
    %v233 = vpop.trf.xlu0
    %v234 = vpop.trf.xlu0
    %v235 = vpop.trf.xlu0
    %v236 = vmul.f32 %v43, %v43
    %v237 = vsel %vm46, %v236, 0.0
    %238 = vadd.xlane.f32.xlu0 %v237
    %v239 = vpop.xlane.xlu0 %238
    %v240 = vrsqrt.pop %v239
    %v241 = vmul.f32 %v239, %v240
    %vm242 = vcmp.eq.f32.partialorder %v239, inf
    %v243 = vsel %vm242, %v239, %v241
    %vm244 = vcmp.eq.f32.partialorder %v239, 0.0
    %v245 = vand.u32 %v239, 2147483648
    %v246 = vsel %vm244, %v245, %v243
    %v247 = vmul.f32 %v41, %v43
    %v248 = vsel %vm46, %v247, 0.0
    %249 = vadd.xlane.f32.xlu0 %v248
    %v250 = vpop.xlane.xlu0 %249
    %v251 = vmul.f32 %v133, %v246
    %v252 = vmax.f32 %v251, 1e-08
    %v253 = vrcp.pop %v252
    %v254 = vmul.f32 %v250, %v253
    %v255 = vadd.f32 %v184, 0.0
    %v256 = vlaneseq
    %v257 = vshrl.u32 %v256, 7
    %v258 = vstv %s39
    %v259 = vadd.s32 %v258, %v257
    %v260 = vlaneseq
    %v261 = vand.u32 %v260, 127
    %vm262 = vcmp.ne.s32.totalorder %v259, %v261
    %v263 = vsel %vm262, 1, 0
    %v264 = vcvt.s32.f32 %v263
    %v265 = vsub.f32 %v255, %v254
    %v266 = vmax.f32 %v265, 0.0
    %v267 = vmul.f32 %v264, %v266
    %v268 = vlaneseq
    %v269 = vshrl.u32 %v268, 7
    %v270 = vsub.s32 0, %v269
    %v271 = vrot.slane %v220, %v270
    %v272 = vsub.f32 %v255, %v271
    %v273 = vmax.f32 %v272, 0.0
    %v274 = vmul.f32 %v264, %v273
    %vm275 = vcmask 64512
    %v276 = vsel %vm275, %v267, 0.0
    %277 = vadd.xlane.f32.xlu0 %v276
    %v278 = vpop.xlane.xlu0 %277
    %v279 = vrot.slane %v278, 4
    %v280 = vadd.f32 %v278, %v279
    %v281 = vrot.slane %v280, 2
    %v282 = vadd.f32 %v280, %v281
    %v283 = vrot.slane %v282, 1
    %v284 = vadd.f32 %v282, %v283
    %s285 = vtos %v284
    %v286 = vsel %vm275, %v274, 0.0
    %v287 = vrot.slane %v286, 4
    %v288 = vadd.f32 %v286, %v287
    %v289 = vrot.slane %v288, 2
    %v290 = vadd.f32 %v288, %v289
    %v291 = vrot.slane %v290, 1
    %v292 = vadd.f32 %v290, %v291
    %v293 = vstv %s285
    %vm294 = vcmask 0
    %295 = vst.msk [vmem:[#allocation7] sm:$0x1] %vm294, %v293
    %vm296 = vcmask 57344
    %297 = vst.msk [vmem:[#allocation8] sm:$0x1] %vm296, %v292
    // Predicated region
    $region18: #{tpu_custom_call.1} parent=1 // pred_check
      _
    $region19: #{tpu_custom_call.1} parent=1 // pred_check_branch
      %299 = sbr.rel (0) target = $region21
    $region20: #{tpu_custom_call.1} parent=1 // pred_region
      %s301 = ssub.s32 16, 16
      %302 = vsyncadd [#allocation4], %s301
      %s304 = sshll.u32 [#allocation7], 4
      %s305 = int_to_ptr.vmem [resolvable:$true] %s304
      %307 = dma.vmem_to_hbm [thread:$0]  %s305, 16, %s2, [#allocation4]
    $region21: #{tpu_custom_call.1} parent=1 // pred_fallthru
      _
    // Predicated region
    $region22: #{tpu_custom_call.1} parent=1 // pred_check
      _
    $region23: #{tpu_custom_call.1} parent=1 // pred_check_branch
      %309 = sbr.rel (0) target = $region25
    $region24: #{tpu_custom_call.1} parent=1 // pred_region
      %s311 = ssub.s32 16, 16
      %312 = vsyncadd [#allocation9], %s311
      %s314 = sshll.u32 [#allocation8], 4
      %s315 = int_to_ptr.vmem [resolvable:$true] %s314
      %317 = dma.vmem_to_hbm [thread:$0]  %s315, 16, %s3, [#allocation9]
    $region25: #{tpu_custom_call.1} parent=1 // pred_fallthru
      _
    // Predicated region
    $region26: #{tpu_custom_call.1} parent=1 // pred_check
      _
    $region27: #{tpu_custom_call.1} parent=1 // pred_check_branch
      %319 = sbr.rel (0) target = $region29
    $region28: #{tpu_custom_call.1} parent=1 // pred_region
      %320 = dma.done [#allocation4], 16
    $region29: #{tpu_custom_call.1} parent=1 // pred_fallthru
      _
    // Predicated region
    $region30: #{tpu_custom_call.1} parent=1 // pred_check
      _
    $region31: #{tpu_custom_call.1} parent=1 // pred_check_branch
      %322 = sbr.rel (0) target = $region33
    $region32: #{tpu_custom_call.1} parent=1 // pred_region
      %323 = dma.done [#allocation9], 16
    $region33: #{tpu_custom_call.1} parent=1 // pred_fallthru
      _
    %324 = vsyncpa [#allocation3], 1
    %325 = vsyncpa [#allocation6], 1
    %326 = vsyncpa [#allocation4], 1
    %327 = vsyncpa [#allocation9], 1

</llo_original>
